<compile_context>
chip_gen: v7x
topology: tpu7x:2x2x1
jax: 0.10.0
libtpu: 0.0.40
codegen_flags: <defaults>
</compile_context>

<pallas_src>
import functools

import jax
import jax.numpy as jnp
from jax.experimental import pallas as pl
from jax.experimental.pallas import tpu as pltpu


def _round_up(x, m):
    return ((x + m - 1) // m) * m


def _cdiv(a, b):
    return -(-a // b)


# ---------------------------------------------------------------------------
# Kernel
# ---------------------------------------------------------------------------
def _flood_frame_kernel(tmpl_ref, par_ref, out_ref, *, use_angles):
    """
    tmpl_ref : (2P, 4) interleaved template; row 2p+j describes component j of
               patch point p. cols: [px, py, is_x_row, pad]  (grid-invariant)
    par_ref  : (n_par, tm) packed per-cell params, lane-dense along M.
               R branch: rows r00, r01, r10, r11, tx, ty, C
               q branch: rows angle, tx, ty, C
    out_ref  : (2P, tm)  row 2p -> x of point p, row 2p+1 -> y of point p
    """
    px = tmpl_ref[:, 0:1]                     # (2P, 1)
    py = tmpl_ref[:, 1:2]                     # (2P, 1)
    is_x = tmpl_ref[:, 2:3] > 0.5             # (2P, 1) True on even (x) rows

    if use_angles:
        ang = par_ref[0:1, :]                 # (1, tm)
        cos = jnp.cos(ang)                    # EUP slot (otherwise idle)
        sin = jnp.sin(ang)
        r00, r01, r10, r11 = cos, -sin, sin, cos
        tx, ty, c = par_ref[1:2, :], par_ref[2:3, :], par_ref[3:4, :]
    else:
        r00, r01 = par_ref[0:1, :], par_ref[1:2, :]
        r10, r11 = par_ref[2:3, :], par_ref[3:4, :]
        tx, ty, c = par_ref[4:5, :], par_ref[5:6, :], par_ref[6:7, :]

    # Row-parity select folds the x/y interleave into pure VPU broadcast math:
    # out[2p+j, m] = C[m] * (R[m,j,0]*px[p] + R[m,j,1]*py[p] + t[m,j])
    ra = jnp.where(is_x, r00, r10)            # (2P, tm)
    rb = jnp.where(is_x, r01, r11)
    tt = jnp.where(is_x, tx, ty)
    out_ref[...] = (c * (px * ra + py * rb + tt)).astype(out_ref.dtype)


# ---------------------------------------------------------------------------
# Tiling heuristic
# ---------------------------------------------------------------------------
def _pick_tiling(m128, p, n_par, out_bytes, vmem_budget=12 << 20):
    """Pick lane-tile width tm and padded M (exact multiple of tm)."""
    # Double-buffered block bytes per lane column: output (2P rows) + params.
    bytes_per_col = (2 * p) * out_bytes * 2 + n_par * 4 * 2
    tm_cap = min(32768, max(128, (vmem_budget // bytes_per_col) // 128 * 128))
    steps = max(1, _cdiv(m128, tm_cap))
    # Prefer more grid steps (v7x dual-TC, deeper pipeline) while every tile
    # still writes >= ~1 MiB so the ~0.35 us/step fixed overhead is amortized.
    min_tm = max(128, _round_up((1 << 20) // (2 * p * out_bytes), 128))
    while steps < 8 and _round_up(_cdiv(m128, steps + 1), 128) >= min_tm:
        steps += 1
    tm = _round_up(_cdiv(m128, steps), 128)
    return tm, steps * tm


# ---------------------------------------------------------------------------
# Wrapper
# ---------------------------------------------------------------------------
def flood_frame_builder(patch_template, t, C, R=None, q=None, *,
                        out_dtype=jnp.float32):
    """
    patch_template : (1, 1, P, 2)
    t              : (B, N, 2)
    C              : (B, N)
    R              : (B, N, 2, 2) or None
    q              : (B, N, 1) angles, used iff R is None
    returns        : (B, N, P, 2)   (out_dtype; jnp.bfloat16 allowed if the
                                     consumer tolerates it — halves writeback)
    """
    B, N, _ = t.shape
    P = patch_template.shape[2]
    M = B * N

    if R is None:
        if q is None:
            raise ValueError("Either R or q must be provided.")
        rows = [q[..., 0], t[..., 0], t[..., 1], C]
        use_angles = True
    else:
        rows = [R[..., 0, 0], R[..., 0, 1], R[..., 1, 0], R[..., 1, 1],
                t[..., 0], t[..., 1], C]
        use_angles = False
    n_par = len(rows)

    params = jnp.stack(rows, axis=0).astype(jnp.float32).reshape(n_par, M)

    m128 = _round_up(M, 128)
    out_bytes = jnp.dtype(out_dtype).itemsize
    tm, m_pad = _pick_tiling(m128, P, n_par, out_bytes)
    if m_pad != M:
        # C = 0 (and angle/t = 0) in the pad region; pad lanes are sliced off.
        params = jnp.pad(params, ((0, 0), (0, m_pad - M)))

    # Interleaved template: row 2p+j carries patch point p, component j.
    tmpl2 = patch_template.reshape(P, 2).astype(jnp.float32)
    pxi = jnp.repeat(tmpl2[:, 0], 2)                                  # (2P,)
    pyi = jnp.repeat(tmpl2[:, 1], 2)                                  # (2P,)
    is_x = jnp.tile(jnp.array([1.0, 0.0], jnp.float32), P)            # (2P,)
    tmpl_i = jnp.stack([pxi, pyi, is_x, jnp.zeros_like(is_x)], axis=1)  # (2P,4)

    grid = (m_pad // tm,)
    out = pl.pallas_call(
        functools.partial(_flood_frame_kernel, use_angles=use_angles),
        out_shape=jax.ShapeDtypeStruct((2 * P, m_pad), out_dtype),
        grid=grid,
        in_specs=[
            pl.BlockSpec((2 * P, 4), lambda i: (0, 0)),      # template
            pl.BlockSpec((n_par, tm), lambda i: (0, i)),     # packed params
        ],
        out_specs=pl.BlockSpec((2 * P, tm), lambda i: (0, i)),
        compiler_params=pltpu.CompilerParams(
            dimension_semantics=("parallel",)),              # dual-TC on v7x
    )(tmpl_i, params)

    # Single boundary re-layout: (2P, M) -> (M, 2P) -> (B, N, P, 2).
    # The reshape is free (row-major) because x/y are already interleaved.
    return out[:, :M].T.reshape(B, N, P, 2)


# ---------------------------------------------------------------------------
# Main
# ---------------------------------------------------------------------------
if __name__ == "__main__":
    key = jax.random.PRNGKey(0)
    k_r, k_t, k_c, k_q, k_p = jax.random.split(key, 5)

    # Small shapes consistent with the module.
    B, N, P = 2, 64, 16

    patch_template = jax.random.normal(k_p, (1, 1, P, 2), dtype=jnp.float32)
    t = jax.random.normal(k_t, (B, N, 2), dtype=jnp.float32)
    C = (jax.random.uniform(k_c, (B, N)) > 0.3).astype(jnp.float32)

    patch = jnp.broadcast_to(patch_template, (B, N, P, 2))

    # --- branch 1: explicit rotation matrices R (B, N, 2, 2) ---
    angles = jax.random.uniform(k_r, (B, N), minval=-jnp.pi, maxval=jnp.pi,
                                dtype=jnp.float32)
    cos, sin = jnp.cos(angles), jnp.sin(angles)
    R = jnp.stack([jnp.stack([cos, -sin], axis=-1),
                   jnp.stack([sin, cos], axis=-1)], axis=-2)   # (B, N, 2, 2)

    X = flood_frame_builder(patch_template, t, C, R=R)
    X = jax.block_until_ready(X)

    X_ref = jnp.einsum('bnij,bnpj->bnpi', R, patch) + t[:, :, None, :]
    X_ref = X_ref * C[:, :, None, None]
    assert X.shape == (B, N, P, 2)
    assert jnp.allclose(X, X_ref, atol=1e-5, rtol=1e-5)

    # --- branch 2: angles q (B, N, 1), R=None (cos/sin computed in-kernel) ---
    q = jax.random.uniform(k_q, (B, N, 1), minval=-jnp.pi, maxval=jnp.pi,
                           dtype=jnp.float32)
    Xq = flood_frame_builder(patch_template, t, C, R=None, q=q)
    Xq = jax.block_until_ready(Xq)

    ang = q[..., 0]
    cq, sq = jnp.cos(ang), jnp.sin(ang)
    Rq = jnp.stack([jnp.stack([cq, -sq], axis=-1),
                    jnp.stack([sq, cq], axis=-1)], axis=-2)
    Xq_ref = jnp.einsum('bnij,bnpj->bnpi', Rq, patch) + t[:, :, None, :]
    Xq_ref = Xq_ref * C[:, :, None, None]
    assert jnp.allclose(Xq, Xq_ref, atol=1e-4, rtol=1e-4)

    print("KERNEL_OK")
</pallas_src>

<mosaic_0001>
module attributes {stable_mosaic.version = 11 : i64} {
  func.func @_flood_frame_kernel(%arg0: i32, %arg1: memref<32x4xf32, #tpu.memory_space<vmem>>, %arg2: memref<7x128xf32, #tpu.memory_space<vmem>>, %arg3: memref<32x128xf32, #tpu.memory_space<vmem>>) attributes {dimension_semantics = [#tpu.dimension_semantics<parallel>], iteration_bounds = array<i64: 1>, scalar_prefetch = 0 : i64, scratch_operands = 0 : i64, tpu.core_type = #tpu.core_type<tc>, window_params = [{pipeline_mode = #tpu.pipeline_mode<synchronous>, transform_indices = @transform_0, window_bounds = array<i64: 32, 4>}, {transform_indices = @transform_1, window_bounds = array<i64: 7, 128>}, {transform_indices = @transform_2, window_bounds = array<i64: 32, 128>}]} {
    %c0 = arith.constant 0 : index
    %c0_0 = arith.constant 0 : index
    %0 = vector.load %arg1[%c0, %c0_0] : memref<32x4xf32, #tpu.memory_space<vmem>>, vector<32x1xf32>
    %c0_1 = arith.constant 0 : index
    %c1 = arith.constant 1 : index
    %1 = vector.load %arg1[%c0_1, %c1] : memref<32x4xf32, #tpu.memory_space<vmem>>, vector<32x1xf32>
    %c0_2 = arith.constant 0 : index
    %c2 = arith.constant 2 : index
    %2 = vector.load %arg1[%c0_2, %c2] : memref<32x4xf32, #tpu.memory_space<vmem>>, vector<32x1xf32>
    %cst = arith.constant 5.000000e-01 : f32
    %3 = vector.broadcast %cst : f32 to vector<32x1xf32>
    %4 = arith.cmpf ogt, %2, %3 : vector<32x1xf32>
    %c0_3 = arith.constant 0 : index
    %c0_4 = arith.constant 0 : index
    %5 = vector.load %arg2[%c0_3, %c0_4] : memref<7x128xf32, #tpu.memory_space<vmem>>, vector<1x128xf32>
    %c1_5 = arith.constant 1 : index
    %c0_6 = arith.constant 0 : index
    %6 = vector.load %arg2[%c1_5, %c0_6] : memref<7x128xf32, #tpu.memory_space<vmem>>, vector<1x128xf32>
    %c2_7 = arith.constant 2 : index
    %c0_8 = arith.constant 0 : index
    %7 = vector.load %arg2[%c2_7, %c0_8] : memref<7x128xf32, #tpu.memory_space<vmem>>, vector<1x128xf32>
    %c3 = arith.constant 3 : index
    %c0_9 = arith.constant 0 : index
    %8 = vector.load %arg2[%c3, %c0_9] : memref<7x128xf32, #tpu.memory_space<vmem>>, vector<1x128xf32>
    %c4 = arith.constant 4 : index
    %c0_10 = arith.constant 0 : index
    %9 = vector.load %arg2[%c4, %c0_10] : memref<7x128xf32, #tpu.memory_space<vmem>>, vector<1x128xf32>
    %c5 = arith.constant 5 : index
    %c0_11 = arith.constant 0 : index
    %10 = vector.load %arg2[%c5, %c0_11] : memref<7x128xf32, #tpu.memory_space<vmem>>, vector<1x128xf32>
    %c6 = arith.constant 6 : index
    %c0_12 = arith.constant 0 : index
    %11 = vector.load %arg2[%c6, %c0_12] : memref<7x128xf32, #tpu.memory_space<vmem>>, vector<1x128xf32>
    %12 = vector.shape_cast %4 : vector<32x1xi1> to vector<32x1xi1>
    %13 = vector.broadcast %12 : vector<32x1xi1> to vector<32x128xi1>
    %14 = vector.shape_cast %5 : vector<1x128xf32> to vector<1x128xf32>
    %15 = vector.broadcast %14 : vector<1x128xf32> to vector<32x128xf32>
    %16 = vector.shape_cast %7 : vector<1x128xf32> to vector<1x128xf32>
    %17 = vector.broadcast %16 : vector<1x128xf32> to vector<32x128xf32>
    %18 = arith.select %13, %15, %17 : vector<32x128xi1>, vector<32x128xf32>
    %19 = vector.shape_cast %4 : vector<32x1xi1> to vector<32x1xi1>
    %20 = vector.broadcast %19 : vector<32x1xi1> to vector<32x128xi1>
    %21 = vector.shape_cast %6 : vector<1x128xf32> to vector<1x128xf32>
    %22 = vector.broadcast %21 : vector<1x128xf32> to vector<32x128xf32>
    %23 = vector.shape_cast %8 : vector<1x128xf32> to vector<1x128xf32>
    %24 = vector.broadcast %23 : vector<1x128xf32> to vector<32x128xf32>
    %25 = arith.select %20, %22, %24 : vector<32x128xi1>, vector<32x128xf32>
    %26 = vector.shape_cast %4 : vector<32x1xi1> to vector<32x1xi1>
    %27 = vector.broadcast %26 : vector<32x1xi1> to vector<32x128xi1>
    %28 = vector.shape_cast %9 : vector<1x128xf32> to vector<1x128xf32>
    %29 = vector.broadcast %28 : vector<1x128xf32> to vector<32x128xf32>
    %30 = vector.shape_cast %10 : vector<1x128xf32> to vector<1x128xf32>
    %31 = vector.broadcast %30 : vector<1x128xf32> to vector<32x128xf32>
    %32 = arith.select %27, %29, %31 : vector<32x128xi1>, vector<32x128xf32>
    %33 = vector.broadcast %0 : vector<32x1xf32> to vector<32x128xf32>
    %34 = arith.mulf %33, %18 : vector<32x128xf32>
    %35 = vector.broadcast %1 : vector<32x1xf32> to vector<32x128xf32>
    %36 = arith.mulf %35, %25 : vector<32x128xf32>
    %37 = arith.addf %34, %36 : vector<32x128xf32>
    %38 = arith.addf %37, %32 : vector<32x128xf32>
    %39 = vector.broadcast %11 : vector<1x128xf32> to vector<32x128xf32>
    %40 = arith.mulf %39, %38 : vector<32x128xf32>
    %c0_13 = arith.constant 0 : index
    %c0_14 = arith.constant 0 : index
    %41 = vector.load %arg3[%c0_13, %c0_14] : memref<32x128xf32, #tpu.memory_space<vmem>>, vector<32x128xf32>
    tpu.vector_store %arg3[%c0_13, %c0_14], %40 {strides = array<i32>} : memref<32x128xf32, #tpu.memory_space<vmem>>, vector<32x128xf32>,
    return
  }
  func.func @transform_0(%arg0: i32) -> (i32, i32) {
    %c0_i32 = arith.constant 0 : i32
    %c0_i32_0 = arith.constant 0 : i32
    %c0_i32_1 = arith.constant 0 : i32
    return %c0_i32, %c0_i32_0 : i32, i32
  }
  func.func @transform_1(%arg0: i32) -> (i32, i32) {
    %c0_i32 = arith.constant 0 : i32
    %c0_i32_0 = arith.constant 0 : i32
    return %c0_i32, %arg0 : i32, i32
  }
  func.func @transform_2(%arg0: i32) -> (i32, i32) {
    %c0_i32 = arith.constant 0 : i32
    %c0_i32_0 = arith.constant 0 : i32
    return %c0_i32, %arg0 : i32, i32
  }
}

</mosaic_0001>

<llo_original>
// kernel: tpu_custom_call.1
$region0: #{tpu_custom_call.1}
  #allocation0 [shape = 'u32[]', space=smem, size = 0x4, offset = 0x4, fixed_abs, tag = 'smem constant byte address 0x4 - core index']
  #allocation1 [shape = 'u32[144,128]{1,0:T(1,128)}', space=vmem, size = 0x12000, scoped, tag = 'internal scratch']
  %s0 = inlined_call_operand.vmem [shape: f32[32,4], index: 0, kind: input, shape index: {}]
  %s1 = inlined_call_operand.vmem [shape: f32[7,128], index: 1, kind: input, shape index: {}]
  %s2 = inlined_call_operand.hbm [shape: f32[32,128], index: 2, kind: output, shape index: {}]
  %s3 = sld [smem:[#allocation0]]
  $region18: #{tpu_custom_call.1} parent=0
    _
  %s5 = ssub.s32 1, %s3
  %s6 = scalar_select 0, %s5, %s3
  $region1: #{tpu_custom_call.1} parent=0
    #allocation2 [shape = 'u8[16384]{0}', space=vmem, size = 0x4000, scoped, tag = 'output window, operand 0, single buffered']
    #allocation3 [shape = 's32[1]{0}', space=sflag, size = 0x4, scoped, tag = 'scoped memory for tpu_custom_call.1']
    %7 = vsyncpa [#allocation3], 0
    // Predicated region
    $region2: #{tpu_custom_call.1} parent=1 // pred_check
      _
    $region3: #{tpu_custom_call.1} parent=1 // pred_check_branch
      %9 = sbr.rel (0) target = $region5
    $region4: #{tpu_custom_call.1} parent=1 // pred_region
      _
    $region5: #{tpu_custom_call.1} parent=1 // pred_fallthru
      _
    // Predicated region
    $region6: #{tpu_custom_call.1} parent=1 // pred_check
      _
    $region7: #{tpu_custom_call.1} parent=1 // pred_check_branch
      %11 = sbr.rel (0) target = $region9
    $region8: #{tpu_custom_call.1} parent=1 // pred_region
      _
    $region9: #{tpu_custom_call.1} parent=1 // pred_fallthru
      _
    %v12 = vld [vmem:[%s0] sm:$0xff]
    %v13 = vld [vmem:[%s0 + $0x8] sm:$0xff]
    %v14 = vld [vmem:[%s0 + $0x10] sm:$0xff]
    %v15 = vld [vmem:[%s0 + $0x18] sm:$0xff]
    %vm16 = vcmp.gt.f32.partialorder %v12, 0.5
    %vm17 = vcmp.gt.f32.partialorder %v13, 0.5
    %vm18 = vcmp.gt.f32.partialorder %v14, 0.5
    %vm19 = vcmp.gt.f32.partialorder %v15, 0.5
    %v20 = vld [vmem:[%s1] sm:$0x1]
    %v21 = vld [vmem:[%s1 + $0x1] sm:$0x1]
    %v22 = vld [vmem:[%s1 + $0x2] sm:$0x1]
    %v23 = vld [vmem:[%s1 + $0x3] sm:$0x1]
    %v24 = vld [vmem:[%s1 + $0x4] sm:$0x1]
    %v25 = vld [vmem:[%s1 + $0x5] sm:$0x1]
    %v26 = vld [vmem:[%s1 + $0x6] sm:$0x1]
    %v27 = vsel %vm16, 1, 0
    %v28 = vsel %vm17, 1, 0
    %v29 = vsel %vm18, 1, 0
    %v30 = vsel %vm19, 1, 0
    %31 = vset.pattern.permute.xlu0 2
    %32 = vperm.xlu0 %31, %v27
    %v33 = vpop.permute.xlu0 %32
    %34 = vset.pattern.permute.xlu0 2
    %35 = vperm.xlu0 %34, %v28
    %v36 = vpop.permute.xlu0 %35
    %37 = vset.pattern.permute.xlu0 2
    %38 = vperm.xlu0 %37, %v29
    %v39 = vpop.permute.xlu0 %38
    %40 = vset.pattern.permute.xlu0 2
    %41 = vperm.xlu0 %40, %v30
    %v42 = vpop.permute.xlu0 %41
    %vm43 = vcmp.eq.s32.totalorder %v33, 1
    %vm44 = vcmp.eq.s32.totalorder %v36, 1
    %vm45 = vcmp.eq.s32.totalorder %v39, 1
    %vm46 = vcmp.eq.s32.totalorder %v42, 1
    %v47 = vlaneseq
    %v48 = vshrl.u32 %v47, 7
    %v49 = vsub.s32 0, %v48
    %v50 = vrot.slane %v20, %v49
    %v51 = vlaneseq
    %v52 = vshrl.u32 %v51, 7
    %v53 = vsub.s32 0, %v52
    %v54 = vrot.slane %v22, %v53
    %v55 = vsel %vm43, %v50, %v54
    %v56 = vsel %vm44, %v50, %v54
    %v57 = vsel %vm45, %v50, %v54
    %v58 = vsel %vm46, %v50, %v54
    %v59 = vlaneseq
    %v60 = vshrl.u32 %v59, 7
    %v61 = vsub.s32 0, %v60
    %v62 = vrot.slane %v21, %v61
    %v63 = vlaneseq
    %v64 = vshrl.u32 %v63, 7
    %v65 = vsub.s32 0, %v64
    %v66 = vrot.slane %v23, %v65
    %v67 = vsel %vm43, %v62, %v66
    %v68 = vsel %vm44, %v62, %v66
    %v69 = vsel %vm45, %v62, %v66
    %v70 = vsel %vm46, %v62, %v66
    %v71 = vlaneseq
    %v72 = vshrl.u32 %v71, 7
    %v73 = vsub.s32 0, %v72
    %v74 = vrot.slane %v24, %v73
    %v75 = vlaneseq
    %v76 = vshrl.u32 %v75, 7
    %v77 = vsub.s32 0, %v76
    %v78 = vrot.slane %v25, %v77
    %v79 = vsel %vm43, %v74, %v78
    %v80 = vsel %vm44, %v74, %v78
    %v81 = vsel %vm45, %v74, %v78
    %v82 = vsel %vm46, %v74, %v78
    %84 = vset.pattern.permute.xlu0 0
    %85 = vperm.xlu0 %84, %v12
    %v86 = vpop.permute.xlu0 %85
    %89 = vset.pattern.permute.xlu0 0
    %90 = vperm.xlu0 %89, %v13
    %v91 = vpop.permute.xlu0 %90
    %94 = vset.pattern.permute.xlu0 0
    %95 = vperm.xlu0 %94, %v14
    %v96 = vpop.permute.xlu0 %95
    %99 = vset.pattern.permute.xlu0 0
    %100 = vperm.xlu0 %99, %v15
    %v101 = vpop.permute.xlu0 %100
    %v103 = vmul.f32 %v86, %v55
    %v104 = vmul.f32 %v91, %v56
    %v105 = vmul.f32 %v96, %v57
    %v106 = vmul.f32 %v101, %v58
    %107 = vset.pattern.permute.xlu0 1
    %108 = vperm.xlu0 %107, %v12
    %v109 = vpop.permute.xlu0 %108
    %111 = vset.pattern.permute.xlu0 1
    %112 = vperm.xlu0 %111, %v13
    %v113 = vpop.permute.xlu0 %112
    %115 = vset.pattern.permute.xlu0 1
    %116 = vperm.xlu0 %115, %v14
    %v117 = vpop.permute.xlu0 %116
    %119 = vset.pattern.permute.xlu0 1
    %120 = vperm.xlu0 %119, %v15
    %v121 = vpop.permute.xlu0 %120
    %v123 = vmul.f32 %v109, %v67
    %v124 = vmul.f32 %v113, %v68
    %v125 = vmul.f32 %v117, %v69
    %v126 = vmul.f32 %v121, %v70
    %v127 = vadd.f32 %v103, %v123
    %v128 = vadd.f32 %v104, %v124
    %v129 = vadd.f32 %v105, %v125
    %v130 = vadd.f32 %v106, %v126
    %v131 = vadd.f32 %v127, %v79
    %v132 = vadd.f32 %v128, %v80
    %v133 = vadd.f32 %v129, %v81
    %v134 = vadd.f32 %v130, %v82
    %v135 = vlaneseq
    %v136 = vshrl.u32 %v135, 7
    %v137 = vsub.s32 0, %v136
    %v138 = vrot.slane %v26, %v137
    %v139 = vmul.f32 %v138, %v131
    %v140 = vmul.f32 %v138, %v132
    %v141 = vmul.f32 %v138, %v133
    %v142 = vmul.f32 %v138, %v134
    %143 = vst [vmem:[#allocation2] sm:$0xff] %v139
    %144 = vst [vmem:[#allocation2 + $0x8] sm:$0xff] %v140
    %145 = vst [vmem:[#allocation2 + $0x10] sm:$0xff] %v141
    %146 = vst [vmem:[#allocation2 + $0x18] sm:$0xff] %v142
    // Predicated region
    $region10: #{tpu_custom_call.1} parent=1 // pred_check
      _
    $region11: #{tpu_custom_call.1} parent=1 // pred_check_branch
      %148 = sbr.rel (0) target = $region13
    $region12: #{tpu_custom_call.1} parent=1 // pred_region
      %s150 = ssub.s32 512, 512
      %151 = vsyncadd [#allocation3], %s150
      %s152 = sshll.u32 [#allocation2], 4
      %s153 = int_to_ptr.vmem [resolvable:$true] %s152
      %158 = dma.vmem_to_hbm [thread:$0]  %s153, 512, %s2, [#allocation3], 128, 128, 8
    $region13: #{tpu_custom_call.1} parent=1 // pred_fallthru
      _
    // Predicated region
    $region14: #{tpu_custom_call.1} parent=1 // pred_check
      _
    $region15: #{tpu_custom_call.1} parent=1 // pred_check_branch
      %160 = sbr.rel (0) target = $region17
    $region16: #{tpu_custom_call.1} parent=1 // pred_region
      %161 = dma.done [#allocation3], 512
    $region17: #{tpu_custom_call.1} parent=1 // pred_fallthru
      _
    %162 = vsyncpa [#allocation3], 1

</llo_original>
